<compile_context>
chip_gen: v5e
topology: v5e:2x2
jax: 0.10.0
libtpu: 0.0.40
codegen_flags: <defaults>
</compile_context>

<pallas_src>
import math

import jax
import jax.numpy as jnp
from jax.experimental import pallas as pl
from jax.experimental.pallas import tpu as pltpu


def _round_up(n, m):
    return ((n + m - 1) // m) * m


def _vmem_budget():
    """(vmem_limit_bytes, per-x-block byte budget), generation aware with safe fallback."""
    try:
        vmem = int(pltpu.get_tpu_info().vmem_capacity_bytes)
    except Exception:
        vmem = 64 << 20          # conservative (v7x-sized) fallback
    vmem = max(32 << 20, min(vmem, 256 << 20))
    limit = min((vmem * 3) // 4, 96 << 20)   # scoped VMEM limit, leave headroom
    x_block = limit // 6                     # 2x double-buffer + surviving temporaries
    return limit, x_block


def label_smoothing_loss(x, target, *, size, padding_idx, smoothing=0.0):
    """KLDivLoss(reduction='sum')(x, label-smoothed one-hot(target)) as in the module."""
    N, C = x.shape
    assert C == size

    # ---- hoisted scalar constants (plain Python floats -> no captured constants) ----
    confidence = 1.0 - smoothing
    base = smoothing / (size - 2)
    clogc = confidence * math.log(confidence) if confidence > 0.0 else 0.0
    blogb = base * math.log(base) if base > 0.0 else 0.0
    # per valid row: sum_c td*log(td) = conf*log(conf) + (size-2)*base*log(base)
    ent_const = clogc + (size - 2) * blogb

    # ---- tile sizing: rows per block, chosen by bytes ----
    itemsize = jnp.dtype(x.dtype).itemsize
    vmem_limit, x_block_budget = _vmem_budget()
    TB = x_block_budget // max(C * itemsize, 1)
    TB = max(8, min((TB // 8) * 8, 1024))
    TB = min(TB, _round_up(N, 8))

    nblocks = pl.cdiv(N, TB)                      # row blocks actually covering x
    num_splits = 2 if nblocks >= 2 else 1         # leading "parallel" axis (2 TCs on v7x)
    blocks_per_split = -(-nblocks // num_splits)  # ceil
    total_blocks = num_splits * blocks_per_split

    # Only the tiny target vector is padded (to a whole number of blocks); x is NOT
    # padded/copied in HBM — ragged tail rows are masked inside the kernel.
    target = target.astype(jnp.int32)
    tgt_rows = total_blocks * TB
    if tgt_rows > N:
        target = jnp.pad(target, (0, tgt_rows - N), constant_values=padding_idx)
    target2d = target.reshape(tgt_rows, 1)

    def x_index_map(c, i):
        blk = c * blocks_per_split + i
        return (jnp.minimum(blk, nblocks - 1), 0)   # clamp the (possible) extra block

    def t_index_map(c, i):
        return (c * blocks_per_split + i, 0)

    def kernel(x_ref, t_ref, out_ref, acc_ref):
        c = pl.program_id(0)
        i = pl.program_id(1)

        @pl.when(i == 0)
        def _init():
            acc_ref[...] = jnp.zeros_like(acc_ref)

        xb = x_ref[...].astype(jnp.float32)                 # [TB, C]
        tgt = t_ref[...]                                     # [TB, 1] int32

        col = jax.lax.broadcasted_iota(jnp.int32, (TB, C), 1)
        weight = jnp.where(col == tgt, confidence, base)     # [TB, C]
        cross = jnp.sum(weight * xb, axis=1, keepdims=True)  # [TB, 1]  sum_c td*x (pre-fix)
        # padding column carries weight `base` on valid rows but td there is 0
        cross = cross - base * xb[:, padding_idx:padding_idx + 1]

        # row validity: in-bounds (un-padded x tail) AND target != padding_idx
        blk = c * blocks_per_split + i
        row = blk * TB + jax.lax.broadcasted_iota(jnp.int32, (TB, 1), 0)
        valid = jnp.logical_and(tgt != padding_idx, row < N)

        acc_ref[...] += jnp.where(valid, ent_const - cross, 0.0)

        @pl.when(i == pl.num_programs(1) - 1)
        def _finalize():
            total = jnp.sum(acc_ref[...])
            out_ref[...] = jnp.broadcast_to(total, (8, 128))

    out = pl.pallas_call(
        kernel,
        out_shape=jax.ShapeDtypeStruct((num_splits * 8, 128), jnp.float32),
        grid=(num_splits, blocks_per_split),
        in_specs=[
            pl.BlockSpec((TB, C), x_index_map),
            pl.BlockSpec((TB, 1), t_index_map),
        ],
        out_specs=pl.BlockSpec((8, 128), lambda c, i: (c, 0)),
        scratch_shapes=[pltpu.VMEM((TB, 1), jnp.float32)],
        compiler_params=pltpu.CompilerParams(
            dimension_semantics=("parallel", "arbitrary"),
            vmem_limit_bytes=vmem_limit,
        ),
        cost_estimate=pl.CostEstimate(
            flops=4 * N * C,
            transcendentals=0,
            bytes_accessed=N * C * itemsize + 4 * N + num_splits * 8 * 128 * 4,
        ),
    )(x, target2d)

    # one (8,128) slab per split, each filled with that split's partial sum
    loss = jnp.sum(out[::8, 0])

    # TODO(synk): self.true_dist side-buffer (module state) is not materialized;
    # the module's forward only returns the scalar KL loss.
    return loss


def _reference(x, target, size, padding_idx, smoothing):
    """Pure-JAX mirror of the PyTorch LabelSmoothing.forward."""
    confidence = 1.0 - smoothing
    base = smoothing / (size - 2)
    N, C = x.shape
    x = x.astype(jnp.float32)
    td = jnp.full((N, C), base, jnp.float32)
    td = td.at[jnp.arange(N), target].set(confidence)
    td = td.at[:, padding_idx].set(0.0)
    td = jnp.where((target == padding_idx)[:, None], 0.0, td)
    kl = jnp.where(td > 0, td * (jnp.log(jnp.maximum(td, 1e-30)) - x), 0.0)
    return jnp.sum(kl)


if __name__ == "__main__":
    N, C = 22, 32          # deliberately N % 8 != 0 to exercise the ragged-tail masking
    padding_idx = 0
    smoothing = 0.1

    key = jax.random.PRNGKey(0)
    k1, k2 = jax.random.split(key)
    logits = jax.random.normal(k1, (N, C), dtype=jnp.float32)
    x = jax.nn.log_softmax(logits, axis=-1)            # log-probs, as KLDivLoss expects
    target = jax.random.randint(k2, (N,), 0, C, dtype=jnp.int32)
    # make a couple of rows deterministic padding rows (target == padding_idx)
    target = target.at[3].set(padding_idx).at[7].set(padding_idx)

    loss = label_smoothing_loss(x, target, size=C, padding_idx=padding_idx,
                                smoothing=smoothing)
    loss = jax.block_until_ready(loss)

    ref = _reference(x, target, C, padding_idx, smoothing)
    assert jnp.allclose(loss, ref, atol=1e-4, rtol=1e-5), (loss, ref)

    print("KERNEL_OK")
</pallas_src>

<mosaic_0001>
module attributes {stable_mosaic.version = 11 : i64} {
  func.func @kernel(%arg0: i32, %arg1: i32, %arg2: memref<24x32xf32, #tpu.memory_space<vmem>>, %arg3: memref<24x1xi32, #tpu.memory_space<vmem>>, %arg4: memref<8x128xf32, #tpu.memory_space<vmem>>, %arg5: memref<24x1xf32, #tpu.memory_space<vmem>>) attributes {dimension_semantics = [#tpu.dimension_semantics<parallel>, #tpu.dimension_semantics<arbitrary>], iteration_bounds = array<i64: 1, 1>, scalar_prefetch = 0 : i64, scratch_operands = 1 : i64, tpu.core_type = #tpu.core_type<tc>, window_params = [{transform_indices = @transform_0, window_bounds = array<i64: 24, 32>}, {transform_indices = @transform_1, window_bounds = array<i64: 24, 1>}, {transform_indices = @transform_2, window_bounds = array<i64: 8, 128>}]} {
    %c0_i32 = arith.constant 0 : i32
    %0 = arith.cmpi eq, %arg1, %c0_i32 : i32
    %1 = arith.extui %0 : i1 to i32
    %c0_i32_0 = arith.constant 0 : i32
    %2 = arith.cmpi ne, %1, %c0_i32_0 : i32
    scf.if %2 {
      %cst_16 = arith.constant 0.000000e+00 : f32
      %39 = vector.broadcast %cst_16 : f32 to vector<24x1xf32>
      %c0_17 = arith.constant 0 : index
      %c0_18 = arith.constant 0 : index
      %40 = vector.load %arg5[%c0_17, %c0_18] : memref<24x1xf32, #tpu.memory_space<vmem>>, vector<24x1xf32>
      tpu.vector_store %arg5[%c0_17, %c0_18], %39 {strides = array<i32>} : memref<24x1xf32, #tpu.memory_space<vmem>>, vector<24x1xf32>,
    } else {
    }
    %c0 = arith.constant 0 : index
    %c0_1 = arith.constant 0 : index
    %3 = vector.load %arg2[%c0, %c0_1] : memref<24x32xf32, #tpu.memory_space<vmem>>, vector<24x32xf32>
    %c0_2 = arith.constant 0 : index
    %c0_3 = arith.constant 0 : index
    %4 = vector.load %arg3[%c0_2, %c0_3] : memref<24x1xi32, #tpu.memory_space<vmem>>, vector<24x1xi32>
    %5 = tpu.iota {dimensions = array<i32: 1>} : vector<24x32xi32>
    %6 = vector.broadcast %4 : vector<24x1xi32> to vector<24x32xi32>
    %7 = arith.cmpi eq, %5, %6 : vector<24x32xi32>
    %cst = arith.constant 0.899999976 : f32
    %cst_4 = arith.constant 0.00333333341 : f32
    %8 = vector.broadcast %cst : f32 to vector<24x32xf32>
    %9 = vector.broadcast %cst_4 : f32 to vector<24x32xf32>
    %10 = arith.select %7, %8, %9 : vector<24x32xi1>, vector<24x32xf32>
    %11 = arith.mulf %10, %3 : vector<24x32xf32>
    %cst_5 = arith.constant dense<0.000000e+00> : vector<24xf32>
    %12 = vector.multi_reduction <add>, %11, %cst_5 [1] : vector<24x32xf32> to vector<24xf32>
    %13 = vector.shape_cast %12 : vector<24xf32> to vector<24x1xf32>
    %14 = vector.extract_strided_slice %3 {offsets = [0, 0], sizes = [24, 1], strides = [1, 1]} : vector<24x32xf32> to vector<24x1xf32>
    %cst_6 = arith.constant 0.00333333341 : f32
    %15 = vector.broadcast %cst_6 : f32 to vector<24x1xf32>
    %16 = arith.mulf %15, %14 : vector<24x1xf32>
    %17 = arith.subf %13, %16 : vector<24x1xf32>
    %c1_i32 = arith.constant 1 : i32
    %18 = arith.muli %arg0, %c1_i32 : i32
    %19 = arith.addi %18, %arg1 : i32
    %c24_i32 = arith.constant 24 : i32
    %20 = arith.muli %19, %c24_i32 : i32
    %21 = tpu.iota {dimensions = array<i32: 0>} : vector<24x1xi32>
    %22 = vector.broadcast %20 : i32 to vector<24x1xi32>
    %23 = arith.addi %22, %21 : vector<24x1xi32>
    %c0_i32_7 = arith.constant 0 : i32
    %24 = vector.broadcast %c0_i32_7 : i32 to vector<24x1xi32>
    %25 = arith.cmpi ne, %4, %24 : vector<24x1xi32>
    %c22_i32 = arith.constant 22 : i32
    %26 = vector.broadcast %c22_i32 : i32 to vector<24x1xi32>
    %27 = arith.cmpi slt, %23, %26 : vector<24x1xi32>
    %28 = arith.andi %25, %27 : vector<24x1xi1>
    %c0_8 = arith.constant 0 : index
    %c0_9 = arith.constant 0 : index
    %29 = vector.load %arg5[%c0_8, %c0_9] : memref<24x1xf32, #tpu.memory_space<vmem>>, vector<24x1xf32>
    %cst_10 = arith.constant -0.665202737 : f32
    %30 = vector.broadcast %cst_10 : f32 to vector<24x1xf32>
    %31 = arith.subf %30, %17 : vector<24x1xf32>
    %cst_11 = arith.constant 0.000000e+00 : f32
    %32 = vector.broadcast %cst_11 : f32 to vector<24x1xf32>
    %33 = arith.select %28, %31, %32 : vector<24x1xi1>, vector<24x1xf32>
    %34 = arith.addf %29, %33 : vector<24x1xf32>
    %c0_12 = arith.constant 0 : index
    %c0_13 = arith.constant 0 : index
    %35 = vector.load %arg5[%c0_12, %c0_13] : memref<24x1xf32, #tpu.memory_space<vmem>>, vector<24x1xf32>
    tpu.vector_store %arg5[%c0_12, %c0_13], %34 {strides = array<i32>} : memref<24x1xf32, #tpu.memory_space<vmem>>, vector<24x1xf32>,
    %c0_i32_14 = arith.constant 0 : i32
    %36 = arith.cmpi eq, %arg1, %c0_i32_14 : i32
    %37 = arith.extui %36 : i1 to i32
    %c0_i32_15 = arith.constant 0 : i32
    %38 = arith.cmpi ne, %37, %c0_i32_15 : i32
    scf.if %38 {
      %c0_16 = arith.constant 0 : index
      %c0_17 = arith.constant 0 : index
      %39 = vector.load %arg5[%c0_16, %c0_17] : memref<24x1xf32, #tpu.memory_space<vmem>>, vector<24x1xf32>
      %40 = vector.shape_cast %39 : vector<24x1xf32> to vector<1x24x1xf32>
      %cst_18 = arith.constant dense<0.000000e+00> : vector<1xf32>
      %41 = vector.multi_reduction <add>, %40, %cst_18 [1, 2] : vector<1x24x1xf32> to vector<1xf32>
      %42 = vector.shape_cast %41 : vector<1xf32> to vector<1x1x1xf32>
      %43 = vector.extract %42[0, 0, 0] : f32 from vector<1x1x1xf32>
      %44 = vector.broadcast %43 : f32 to vector<8x128xf32>
      %c0_19 = arith.constant 0 : index
      %c0_20 = arith.constant 0 : index
      %45 = vector.load %arg4[%c0_19, %c0_20] : memref<8x128xf32, #tpu.memory_space<vmem>>, vector<8x128xf32>
      tpu.vector_store %arg4[%c0_19, %c0_20], %44 {strides = array<i32>} : memref<8x128xf32, #tpu.memory_space<vmem>>, vector<8x128xf32>,
    } else {
    }
    return
  }
  func.func @transform_0(%arg0: i32, %arg1: i32) -> (i32, i32) {
    %c1_i32 = arith.constant 1 : i32
    %0 = arith.muli %arg0, %c1_i32 : i32
    %1 = arith.addi %0, %arg1 : i32
    %c0_i32 = arith.constant 0 : i32
    %2 = arith.minsi %1, %c0_i32 : i32
    %c0_i32_0 = arith.constant 0 : i32
    %c0_i32_1 = arith.constant 0 : i32
    return %2, %c0_i32_0 : i32, i32
  }
  func.func @transform_1(%arg0: i32, %arg1: i32) -> (i32, i32) {
    %c1_i32 = arith.constant 1 : i32
    %0 = arith.muli %arg0, %c1_i32 : i32
    %1 = arith.addi %0, %arg1 : i32
    %c0_i32 = arith.constant 0 : i32
    %c0_i32_0 = arith.constant 0 : i32
    return %1, %c0_i32 : i32, i32
  }
  func.func @transform_2(%arg0: i32, %arg1: i32) -> (i32, i32) {
    %c0_i32 = arith.constant 0 : i32
    %c0_i32_0 = arith.constant 0 : i32
    return %arg0, %c0_i32 : i32, i32
  }
}

</mosaic_0001>

<llo_original>
// kernel: tpu_custom_call.1
$region0: #{tpu_custom_call.1}
  #allocation0 [shape = 'u32[]', space=smem, size = 0x4, offset = 0x4, fixed_abs, tag = 'smem constant byte address 0x4 - core index']
  #allocation1 [shape = 'u32[72,128]{1,0:T(1,128)}', space=vmem, size = 0x9000, scoped, tag = 'internal scratch']
  #allocation2 [shape = 'f32[24,1]{1,0:T(8,128)}', space=vmem, size = 0x3000, scoped, tag = 'scratch operand']
  %s0 = inlined_call_operand.vmem [shape: f32[22,32], index: 0, kind: input, shape index: {}]
  %s1 = inlined_call_operand.vmem [shape: s32[24,1], index: 1, kind: input, shape index: {}]
  %s2 = inlined_call_operand.hbm [shape: f32[8,128], index: 2, kind: output, shape index: {}]
  %s3 = sld [smem:[#allocation0]]
  $region26: #{tpu_custom_call.1} parent=0
    _
  %s5 = ssub.s32 1, %s3
  %s6 = scalar_select 0, %s5, %s3
  $region1: #{tpu_custom_call.1} parent=0
    #allocation3 [shape = 'u8[4096]{0}', space=vmem, size = 0x1000, scoped, tag = 'output window, operand 0, single buffered']
    #allocation4 [shape = 's32[1]{0}', space=sflag, size = 0x4, scoped, tag = 'scoped memory for tpu_custom_call.1']
    %7 = vsyncpa [#allocation4], 0
    // Predicated region
    $region2: #{tpu_custom_call.1} parent=1 // pred_check
      _
    $region3: #{tpu_custom_call.1} parent=1 // pred_check_branch
      %9 = sbr.rel (0) target = $region5
    $region4: #{tpu_custom_call.1} parent=1 // pred_region
      %s10 = sadd.s32 0, 0
      %p11 = scmp.lt.s32.totalorder %s10, 0
      %s12 = scalar_select %p11, %s10, 0
      %s13 = smul.u32 3, %s12
      %p14 = scmp.lt.s32.totalorder %s13, 2
      %s15 = scalar_select %p14, %s13, 2
      %s16 = smul.addr %s15, 8
      %s17 = scalar_lea.vmem %s0, %s16
      %s18 = sadd.s32 0, 0
      %p19 = scmp.lt.s32.totalorder %s18, 0
      %s20 = scalar_select %p19, %s18, 0
      %s21 = smul.u32 3, %s20
    $region5: #{tpu_custom_call.1} parent=1 // pred_fallthru
      _
    // Predicated region
    $region6: #{tpu_custom_call.1} parent=1 // pred_check
      _
    $region7: #{tpu_custom_call.1} parent=1 // pred_check_branch
      %23 = sbr.rel (0) target = $region9
    $region8: #{tpu_custom_call.1} parent=1 // pred_region
      %s24 = sadd.s32 0, 0
      %s25 = smul.u32 3, %s24
      %p26 = scmp.lt.s32.totalorder %s25, 2
      %s27 = scalar_select %p26, %s25, 2
      %s28 = smul.addr %s27, 8
      %s29 = scalar_lea.vmem %s1, %s28
      %s30 = sadd.s32 0, 0
      %s31 = smul.u32 3, %s30
    $region9: #{tpu_custom_call.1} parent=1 // pred_fallthru
      _
    %s32 = sadd.s32 0, 0
    %p33 = scmp.lt.s32.totalorder %s32, 0
    %s34 = scalar_select %p33, %s32, 0
    %s35 = smul.u32 3, %s34
    %p36 = scmp.lt.s32.totalorder %s35, 2
    %s37 = scalar_select %p36, %s35, 2
    %s38 = smul.addr %s37, 8
    %s39 = scalar_lea.vmem %s0, %s38
    %s40 = sadd.s32 0, 0
    %s41 = smul.u32 3, %s40
    %p42 = scmp.lt.s32.totalorder %s41, 2
    %s43 = scalar_select %p42, %s41, 2
    %s44 = smul.addr %s43, 8
    %s45 = scalar_lea.vmem %s1, %s44
    %s46 = sadd.s32 0, 0
    %p47 = scmp.lt.s32.totalorder %s46, 0
    %s48 = scalar_select %p47, %s46, 0
    %s49 = smul.u32 3, %s48
    %p50 = scmp.lt.s32.totalorder %s49, 2
    %s51 = scalar_select %p50, %s49, 2
    %s52 = smul.addr %s51, 8
    %s53 = scalar_lea.vmem %s0, %s52
    %s54 = sadd.s32 0, 0
    %p55 = scmp.lt.s32.totalorder %s54, 0
    %s56 = scalar_select %p55, %s54, 0
    %s57 = smul.u32 3, %s56
    %s58 = sadd.s32 0, 0
    %s59 = smul.u32 3, %s58
    %p60 = scmp.lt.s32.totalorder %s59, 2
    %s61 = scalar_select %p60, %s59, 2
    %s62 = smul.addr %s61, 8
    %s63 = scalar_lea.vmem %s1, %s62
    %s64 = sadd.s32 0, 0
    %s65 = smul.u32 3, %s64
    %p66 = scmp.eq.s32.totalorder 0, 0
    // Predicated region
    $region10: #{tpu_custom_call.1} parent=1 // pred_check
      %p67 = pneg %p66
    $region11: #{tpu_custom_call.1} parent=1 // pred_check_branch
      %69 = sbr.rel (%p67) target = $region13
    $region12: #{tpu_custom_call.1} parent=1 // pred_region
      %vm70 = vcmask 7168
      %71 = vst.msk [vmem:[#allocation2] sm:$0xff] %vm70, 0.0
      %72 = vst.msk [vmem:[#allocation2 + $0x8] sm:$0xff] %vm70, 0.0
      %73 = vst.msk [vmem:[#allocation2 + $0x10] sm:$0xff] %vm70, 0.0
    $region13: #{tpu_custom_call.1} parent=1 // pred_fallthru
      _
    %v74 = vld [vmem:[%s53] sm:$0xff]
    %v75 = vld [vmem:[%s53 + $0x8] sm:$0xff]
    %v76 = vld [vmem:[%s53 + $0x10] sm:$0xff]
    %v77 = vld [vmem:[%s63] sm:$0xff]
    %v78 = vld [vmem:[%s63 + $0x8] sm:$0xff]
    %v79 = vld [vmem:[%s63 + $0x10] sm:$0xff]
    %v80 = vlaneseq
    %v81 = vand.u32 %v80, 127
    %82 = vset.pattern.permute.xlu0 0
    %83 = vperm.xlu0 %82, %v77
    %v84 = vpop.permute.xlu0 %83
    %85 = vset.pattern.permute.xlu0 0
    %86 = vperm.xlu0 %85, %v78
    %v87 = vpop.permute.xlu0 %86
    %88 = vset.pattern.permute.xlu0 0
    %89 = vperm.xlu0 %88, %v79
    %v90 = vpop.permute.xlu0 %89
    %vm91 = vcmp.eq.s32.totalorder %v81, %v84
    %vm92 = vcmp.eq.s32.totalorder %v81, %v87
    %vm93 = vcmp.eq.s32.totalorder %v81, %v90
    %v94 = vsel %vm91, 0.9, 0.0033333334
    %v95 = vsel %vm92, 0.9, 0.0033333334
    %v96 = vsel %vm93, 0.9, 0.0033333334
    %v97 = vmul.f32 %v94, %v74
    %v98 = vmul.f32 %v95, %v75
    %v99 = vmul.f32 %v96, %v76
    %vm100 = vcmask 261120
    %v101 = vsel %vm100, %v97, 0.0
    %102 = vadd.xlane.f32.xlu0 %v101
    %v103 = vpop.xlane.xlu0 %102
    %v104 = vsel %vm100, %v98, 0.0
    %105 = vadd.xlane.f32.xlu0 %v104
    %v106 = vpop.xlane.xlu0 %105
    %v107 = vsel %vm100, %v99, 0.0
    %108 = vadd.xlane.f32.xlu0 %v107
    %v109 = vpop.xlane.xlu0 %108
    %v110 = vmul.f32 %v74, 0.0033333334
    %v111 = vmul.f32 %v75, 0.0033333334
    %v112 = vmul.f32 %v76, 0.0033333334
    %v113 = vsub.f32 %v103, %v110
    %v114 = vsub.f32 %v106, %v111
    %v115 = vsub.f32 %v109, %v112
    %s116 = sadd.s32 0, 0
    %s117 = smul.u32 %s116, 24
    %v118 = vlaneseq
    %v119 = vshrl.u32 %v118, 7
    %v120 = vadd.s32 %v119, 8
    %v121 = vadd.s32 %v119, 16
    %v122 = vstv %s117
    %v123 = vadd.s32 %v122, %v119
    %v124 = vadd.s32 %v122, %v120
    %v125 = vadd.s32 %v122, %v121
    %vm126 = vcmp.ne.s32.totalorder %v77, 0
    %vm127 = vcmp.ne.s32.totalorder %v78, 0
    %vm128 = vcmp.ne.s32.totalorder %v79, 0
    %vm129 = vcmp.lt.s32.totalorder %v123, 22
    %vm130 = vcmp.lt.s32.totalorder %v124, 22
    %vm131 = vcmp.lt.s32.totalorder %v125, 22
    %vm132 = vmand %vm126, %vm129
    %vm133 = vmand %vm127, %vm130
    %vm134 = vmand %vm128, %vm131
    %v135 = vld [vmem:[#allocation2] sm:$0xff]
    %v136 = vld [vmem:[#allocation2 + $0x8] sm:$0xff]
    %v137 = vld [vmem:[#allocation2 + $0x10] sm:$0xff]
    %v138 = vsub.f32 -0.66520274, %v113
    %v139 = vsub.f32 -0.66520274, %v114
    %v140 = vsub.f32 -0.66520274, %v115
    %v141 = vsel %vm132, %v138, 0.0
    %v142 = vsel %vm133, %v139, 0.0
    %v143 = vsel %vm134, %v140, 0.0
    %v144 = vadd.f32 %v135, %v141
    %v145 = vadd.f32 %v136, %v142
    %v146 = vadd.f32 %v137, %v143
    %vm147 = vcmask 7168
    %148 = vst.msk [vmem:[#allocation2] sm:$0xff] %vm147, %v144
    %149 = vst.msk [vmem:[#allocation2 + $0x8] sm:$0xff] %vm147, %v145
    %150 = vst.msk [vmem:[#allocation2 + $0x10] sm:$0xff] %vm147, %v146
    // Predicated region
    $region14: #{tpu_custom_call.1} parent=1 // pred_check
      %p151 = pneg %p66
    $region15: #{tpu_custom_call.1} parent=1 // pred_check_branch
      %153 = sbr.rel (%p151) target = $region17
    $region16: #{tpu_custom_call.1} parent=1 // pred_region
      %v154 = vld [vmem:[#allocation2] sm:$0xff]
      %v155 = vld [vmem:[#allocation2 + $0x8] sm:$0xff]
      %v156 = vld [vmem:[#allocation2 + $0x10] sm:$0xff]
      %v157 = vsel %vm147, %v154, 0.0
      %v158 = vsel %vm147, %v155, 0.0
      %v159 = vadd.f32 %v157, %v158
      %v160 = vsel %vm147, %v156, 0.0
      %v161 = vadd.f32 %v159, %v160
      %162 = vadd.xlane.f32.xlu0 %v161
      %v163 = vpop.xlane.xlu0 %162
      %v164 = vrot.slane %v163, 4
      %v165 = vadd.f32 %v163, %v164
      %v166 = vrot.slane %v165, 2
      %v167 = vadd.f32 %v165, %v166
      %v168 = vrot.slane %v167, 1
      %v169 = vadd.f32 %v167, %v168
      %s170 = vtos %v169
      %v171 = vstv %s170
      %172 = vst [vmem:[#allocation3] sm:$0xff] %v171
    $region17: #{tpu_custom_call.1} parent=1 // pred_fallthru
      _
    // Predicated region
    $region18: #{tpu_custom_call.1} parent=1 // pred_check
      _
    $region19: #{tpu_custom_call.1} parent=1 // pred_check_branch
      %174 = sbr.rel (0) target = $region21
    $region20: #{tpu_custom_call.1} parent=1 // pred_region
      %176 = vsyncadd [#allocation4], 0
      %s178 = sshll.u32 [#allocation3], 4
      %s179 = int_to_ptr.vmem [resolvable:$true] %s178
      %s180 = sshll.u32 %s2, 4
      %s181 = int_to_ptr.hbm [resolvable:$true] %s180
      %183 = dma.vmem_to_hbm [thread:$0]  %s179, 128, %s181, [#allocation4]
    $region21: #{tpu_custom_call.1} parent=1 // pred_fallthru
      _
    // Predicated region
    $region22: #{tpu_custom_call.1} parent=1 // pred_check
      _
    $region23: #{tpu_custom_call.1} parent=1 // pred_check_branch
      %185 = sbr.rel (0) target = $region25
    $region24: #{tpu_custom_call.1} parent=1 // pred_region
      %187 = dma.done [#allocation4], 128
    $region25: #{tpu_custom_call.1} parent=1 // pred_fallthru
      _
    %188 = vsyncpa [#allocation4], 1

</llo_original>
